<compile_context>
chip_gen: v7x
topology: tpu7x:2x2x1
jax: 0.10.0
libtpu: 0.0.40
codegen_flags: <defaults>
</compile_context>

<pallas_src>
import functools
import math
from typing import NamedTuple, Tuple

import jax
import jax.numpy as jnp
from jax.experimental import pallas as pl
from jax.experimental.pallas import tpu as pltpu

_LANE = 128                 # vreg lane width  -> lane-dense output stores (unmasked vst)
_SUBLANE = 8                # vreg sublane width -> batch-tile alignment
_PALLAS_MIN_FLOPS = 8 << 20 # below this, Pallas launch overhead dominates -> plain XLA


def _round_up(n: int, m: int) -> int:
    return ((n + m - 1) // m) * m


def _vmem_cap_bytes() -> int:
    """Physical VMEM per TensorCore (generation aware), conservative fallback = v7x 64 MiB."""
    try:
        return int(pltpu.get_tpu_info().vmem_capacity_bytes)
    except Exception:
        return 64 << 20


# --------------------------------- kernels ---------------------------------------------------

def _affine_kernel(x_ref, w_ref, b_ref, o_ref):
    # Collapsed perceptron: y = x @ (W1 @ W2) + (b1 @ W2 + b2); single MXU pass, f32 accumulate.
    y = jnp.dot(x_ref[...], w_ref[...], preferred_element_type=jnp.float32)
    o_ref[...] = (y + b_ref[...]).astype(o_ref.dtype)      # Op % 128 == 0 -> unmasked vst


def _perceptron2_kernel(x_ref, w1_ref, b1_ref, w2_ref, b2_ref, o_ref):
    # Faithful two-dot form: y = (x @ W1 + b1) @ W2 + b2.
    h = jnp.dot(x_ref[...], w1_ref[...], preferred_element_type=jnp.float32)
    h = h + b1_ref[...]                 # epilogue adds stay f32 (v5e has no bf16 VPU)
    h = h.astype(w2_ref.dtype)          # no-op for f32; enables native MXU path for bf16 weights
    y = jnp.dot(h, w2_ref[...], preferred_element_type=jnp.float32)
    o_ref[...] = (y + b2_ref[...]).astype(o_ref.dtype)


# --------------------------------- parameter preparation (one-time) --------------------------

class PerceptronParams(NamedTuple):
    kind: str                       # "affine" (collapsed) or "mlp2" (two dots)
    out_features: int               # un-padded output width
    tensors: Tuple[jax.Array, ...]  # kernel parameter tensors (already packed/padded)


def prepare_perceptron_params(w1, b1, w2, b2, *, collapse: bool = True,
                              compute_dtype=jnp.float32) -> PerceptronParams:
    """One-time param packing, OUTSIDE the per-call path (no per-forward jnp.pad of weights).

    Only the output/N lane dim is zero-padded to 128 (exact: padded columns are zero and are
    sliced off after the kernel).  K / hidden dims stay unpadded.  With `collapse=True` the
    activation-free stack is folded into a single affine map.  `compute_dtype=jnp.bfloat16`
    halves weight VMEM/HBM on v6e/v7x (biases always stay f32 for the epilogue adds).
    """
    O = w2.shape[1]
    Op = _round_up(O, _LANE)
    if collapse:
        w_eff = jnp.dot(w1, w2, preferred_element_type=jnp.float32)        # [K, O]
        b_eff = jnp.dot(b1, w2, preferred_element_type=jnp.float32) + b2   # [O]
        w_eff = jnp.pad(w_eff, ((0, 0), (0, Op - O))).astype(compute_dtype)
        b_eff = jnp.pad(b_eff, (0, Op - O)).reshape(1, Op).astype(jnp.float32)
        return PerceptronParams("affine", O, (w_eff, b_eff))
    w2_p = jnp.pad(w2, ((0, 0), (0, Op - O))).astype(compute_dtype)
    b2_p = jnp.pad(b2, (0, Op - O)).reshape(1, Op).astype(jnp.float32)
    return PerceptronParams(
        "mlp2", O,
        (w1.astype(compute_dtype), b1.reshape(1, -1).astype(jnp.float32), w2_p, b2_p))


# --------------------------------- forward ---------------------------------------------------

@functools.partial(jax.jit, static_argnames=("kind", "out_features", "tm", "single_buffer"))
def _forward_pallas(x, tensors, *, kind, out_features, tm, single_buffer):
    B, K = x.shape
    Op = tensors[-1].shape[-1]              # lane-padded output width (last bias tensor)
    w_dtype = tensors[0].dtype

    # Batch tiling: big, sublane-aligned, waste-balanced tiles (amortize ~0.35us/step overhead);
    # "parallel" grid so v7x's two TensorCores pick up separate batch tiles.
    n_steps = max(1, -(-B // tm))
    tm_eff = _round_up(-(-B // n_steps), _SUBLANE)
    Bp = _round_up(B, tm_eff)
    grid = (Bp // tm_eff,)

    x_p = x.astype(w_dtype)
    if Bp != B:
        x_p = jnp.pad(x_p, ((0, Bp - B), (0, 0)))

    def resident(t):
        # Constant block index across the batch grid -> never re-fetched; single-buffer it so
        # it occupies 1x (not 2x) its size in VMEM.
        if single_buffer:
            return pl.BlockSpec(t.shape, lambda i: (0, 0),
                                pipeline_mode=pl.Buffered(buffer_count=1))
        return pl.BlockSpec(t.shape, lambda i: (0, 0))

    in_specs = ([pl.BlockSpec((tm_eff, K), lambda i: (i, 0))]      # K unpadded (full-dim block)
                + [resident(t) for t in tensors])
    out_specs = pl.BlockSpec((tm_eff, Op), lambda i: (i, 0))       # lane-dense output tile
    kernel = _affine_kernel if kind == "affine" else _perceptron2_kernel

    # ---- honest VMEM budget, clamped to the actual hardware capacity ------------------------
    w_isz = jnp.dtype(w_dtype).itemsize
    param_elems = sum(math.prod(t.shape) for t in tensors)
    resident_bufs = 1 if single_buffer else 2
    h_elems = tm_eff * tensors[0].shape[1] if kind == "mlp2" else 0    # f32 intermediate
    vmem_bytes = (resident_bufs * param_elems * w_isz
                  + 2 * tm_eff * K * w_isz          # double-buffered x tiles
                  + 2 * tm_eff * Op * 4             # double-buffered f32 out tiles
                  + (h_elems + tm_eff * Op) * 4)    # f32 intermediates (4 B regardless of dtype)
    # TODO(synk): for very large in/hidden dims (resident params > ~1/4 VMEM) add a K/H
    # reduction grid axis with an f32 accumulator instead of keeping weights fully resident.
    vmem_limit = int(min(max(2 * vmem_bytes + (4 << 20), 32 << 20),
                         int(0.85 * _vmem_cap_bytes())))

    if kind == "affine":
        flops = 2 * Bp * K * Op
    else:
        H = tensors[0].shape[1]
        flops = 2 * Bp * (K * H + H * Op)
    cost = pl.CostEstimate(flops=flops, transcendentals=0,
                           bytes_accessed=w_isz * (Bp * K + param_elems) + 4 * Bp * Op)

    out_pad = pl.pallas_call(
        kernel,
        out_shape=jax.ShapeDtypeStruct((Bp, Op), jnp.float32),
        grid=grid,
        in_specs=in_specs,
        out_specs=out_specs,
        compiler_params=pltpu.CompilerParams(
            dimension_semantics=("parallel",),
            vmem_limit_bytes=vmem_limit,
        ),
        cost_estimate=cost,
    )(x_p, *tensors)
    return out_pad[:B, :out_features]


@functools.partial(jax.jit, static_argnames=("kind", "out_features"))
def _forward_xla(x, tensors, *, kind, out_features):
    # Fused plain-XLA path for tiny problems (Pallas launch overhead > compute there).
    if kind == "affine":
        w_eff, b_eff = tensors
        y = x.astype(w_eff.dtype) @ w_eff + b_eff
    else:
        w1, b1, w2, b2 = tensors
        h = x.astype(w1.dtype) @ w1 + b1
        y = h.astype(w2.dtype) @ w2 + b2
    return y[:, :out_features].astype(jnp.float32)


def perceptron_forward(x, params: PerceptronParams, *, tm: int = 512,
                       force_pallas: bool = False):
    """Forward pass of the PyTorch `Perceptron`: y = (x @ W1 + b1) @ W2 + b2."""
    kind, out_features, tensors = params
    B, K = x.shape
    if kind == "affine":
        flops = 2 * B * K * tensors[-1].shape[-1]
    else:
        H = tensors[0].shape[1]
        flops = 2 * B * (K * H + H * tensors[-1].shape[-1])
    if not force_pallas and flops < _PALLAS_MIN_FLOPS:
        return _forward_xla(x, tensors, kind=kind, out_features=out_features)
    try:
        return _forward_pallas(x, tensors, kind=kind, out_features=out_features,
                               tm=tm, single_buffer=True)
    except Exception:
        # Fallback for Pallas builds that reject pl.Buffered(buffer_count=1); the VMEM budget
        # above then correctly counts the default double-buffered resident parameters.
        return _forward_pallas(x, tensors, kind=kind, out_features=out_features,
                               tm=tm, single_buffer=False)


if __name__ == "__main__":
    # Small shapes consistent with the module: [batch, input_features] -> hidden -> output.
    batch, in_f, hid_f, out_f = 8, 32, 64, 16

    key = jax.random.PRNGKey(0)
    kx, kw1, kb1, kw2, kb2 = jax.random.split(key, 5)
    x = jax.random.normal(kx, (batch, in_f), dtype=jnp.float32)
    w1 = jax.random.normal(kw1, (in_f, hid_f), dtype=jnp.float32)   # torch.randn-style init
    b1 = jax.random.normal(kb1, (hid_f,), dtype=jnp.float32)
    w2 = jax.random.normal(kw2, (hid_f, out_f), dtype=jnp.float32)
    b2 = jax.random.normal(kb2, (out_f,), dtype=jnp.float32)

    ref = (x @ w1 + b1) @ w2 + b2      # plain-JAX reference (PyTorch forward semantics)

    # 1) Collapsed single-affine Pallas kernel (recommended fast path).
    params_fast = prepare_perceptron_params(w1, b1, w2, b2, collapse=True)
    out_fast = perceptron_forward(x, params_fast, force_pallas=True)
    jax.block_until_ready(out_fast)
    assert out_fast.shape == (batch, out_f), out_fast.shape
    assert jnp.allclose(out_fast, ref, atol=5e-3, rtol=2e-3)

    # 2) Two-dot Pallas kernel preserving the exact layer-by-layer structure of the module.
    params_exact = prepare_perceptron_params(w1, b1, w2, b2, collapse=False)
    out_exact = perceptron_forward(x, params_exact, force_pallas=True)
    jax.block_until_ready(out_exact)
    assert out_exact.shape == (batch, out_f), out_exact.shape
    assert jnp.allclose(out_exact, ref, atol=5e-3, rtol=2e-3)

    # 3) Default dispatcher routes this tiny shape to plain XLA; results agree.
    out_xla = perceptron_forward(x, params_fast)
    jax.block_until_ready(out_xla)
    assert jnp.allclose(out_xla, ref, atol=5e-3, rtol=2e-3)

    print("KERNEL_OK")
</pallas_src>

<mosaic_0001>
module attributes {stable_mosaic.version = 11 : i64} {
  func.func @_affine_kernel(%arg0: i32, %arg1: memref<8x32xf32, #tpu.memory_space<vmem>>, %arg2: memref<32x128xf32, #tpu.memory_space<vmem>>, %arg3: memref<1x128xf32, #tpu.memory_space<vmem>>, %arg4: memref<8x128xf32, #tpu.memory_space<vmem>>) attributes {dimension_semantics = [#tpu.dimension_semantics<parallel>], iteration_bounds = array<i64: 1>, scalar_prefetch = 0 : i64, scratch_operands = 0 : i64, tpu.core_type = #tpu.core_type<tc>, window_params = [{transform_indices = @transform_0, window_bounds = array<i64: 8, 32>}, {pipeline_mode = #tpu.pipeline_mode<synchronous>, transform_indices = @transform_1, window_bounds = array<i64: 32, 128>}, {pipeline_mode = #tpu.pipeline_mode<synchronous>, transform_indices = @transform_2, window_bounds = array<i64: 1, 128>}, {transform_indices = @transform_3, window_bounds = array<i64: 8, 128>}]} {
    %c0 = arith.constant 0 : index
    %c0_0 = arith.constant 0 : index
    %0 = vector.load %arg1[%c0, %c0_0] : memref<8x32xf32, #tpu.memory_space<vmem>>, vector<8x32xf32>
    %c0_1 = arith.constant 0 : index
    %c0_2 = arith.constant 0 : index
    %1 = vector.load %arg2[%c0_1, %c0_2] : memref<32x128xf32, #tpu.memory_space<vmem>>, vector<32x128xf32>
    %cst = arith.constant dense<0.000000e+00> : vector<8x128xf32>
    %2 = tpu.matmul %0, %1, %cst {dimension_numbers = #tpu.dot_dimension_numbers<[1], [0], [0], [1], [0, 0, 1, 1], [], []>} : vector<8x32xf32>, vector<32x128xf32>, vector<8x128xf32> -> vector<8x128xf32>
    %c0_3 = arith.constant 0 : index
    %c0_4 = arith.constant 0 : index
    %3 = vector.load %arg3[%c0_3, %c0_4] : memref<1x128xf32, #tpu.memory_space<vmem>>, vector<1x128xf32>
    %4 = vector.broadcast %3 : vector<1x128xf32> to vector<8x128xf32>
    %5 = arith.addf %2, %4 : vector<8x128xf32>
    %c0_5 = arith.constant 0 : index
    %c0_6 = arith.constant 0 : index
    %6 = vector.load %arg4[%c0_5, %c0_6] : memref<8x128xf32, #tpu.memory_space<vmem>>, vector<8x128xf32>
    tpu.vector_store %arg4[%c0_5, %c0_6], %5 {strides = array<i32>} : memref<8x128xf32, #tpu.memory_space<vmem>>, vector<8x128xf32>,
    return
  }
  func.func @transform_0(%arg0: i32) -> (i32, i32) {
    %c0_i32 = arith.constant 0 : i32
    %c0_i32_0 = arith.constant 0 : i32
    return %arg0, %c0_i32 : i32, i32
  }
  func.func @transform_1(%arg0: i32) -> (i32, i32) {
    %c0_i32 = arith.constant 0 : i32
    %c0_i32_0 = arith.constant 0 : i32
    %c0_i32_1 = arith.constant 0 : i32
    return %c0_i32, %c0_i32_0 : i32, i32
  }
  func.func @transform_2(%arg0: i32) -> (i32, i32) {
    %c0_i32 = arith.constant 0 : i32
    %c0_i32_0 = arith.constant 0 : i32
    %c0_i32_1 = arith.constant 0 : i32
    return %c0_i32, %c0_i32_0 : i32, i32
  }
  func.func @transform_3(%arg0: i32) -> (i32, i32) {
    %c0_i32 = arith.constant 0 : i32
    %c0_i32_0 = arith.constant 0 : i32
    return %arg0, %c0_i32 : i32, i32
  }
}

module attributes {stable_mosaic.version = 11 : i64} {
  func.func @_affine_kernel(%arg0: i32, %arg1: memref<8x32xf32, #tpu.memory_space<vmem>>, %arg2: memref<32x128xf32, #tpu.memory_space<vmem>>, %arg3: memref<1x128xf32, #tpu.memory_space<vmem>>, %arg4: memref<8x128xf32, #tpu.memory_space<vmem>>) attributes {dimension_semantics = [#tpu.dimension_semantics<parallel>], iteration_bounds = array<i64: 1>, scalar_prefetch = 0 : i64, scratch_operands = 0 : i64, tpu.core_type = #tpu.core_type<tc>, window_params = [{transform_indices = @transform_0, window_bounds = array<i64: 8, 32>}, {pipeline_mode = #tpu.pipeline_mode<synchronous>, transform_indices = @transform_1, window_bounds = array<i64: 32, 128>}, {pipeline_mode = #tpu.pipeline_mode<synchronous>, transform_indices = @transform_2, window_bounds = array<i64: 1, 128>}, {transform_indices = @transform_3, window_bounds = array<i64: 8, 128>}]} {
    %c0 = arith.constant 0 : index
    %c0_0 = arith.constant 0 : index
    %0 = vector.load %arg1[%c0, %c0_0] : memref<8x32xf32, #tpu.memory_space<vmem>>, vector<8x32xf32>
    %c0_1 = arith.constant 0 : index
    %c0_2 = arith.constant 0 : index
    %1 = vector.load %arg2[%c0_1, %c0_2] : memref<32x128xf32, #tpu.memory_space<vmem>>, vector<32x128xf32>
    %cst = arith.constant dense<0.000000e+00> : vector<8x128xf32>
    %2 = tpu.matmul %0, %1, %cst {dimension_numbers = #tpu.dot_dimension_numbers<[1], [0], [0], [1], [0, 0, 1, 1], [], []>} : vector<8x32xf32>, vector<32x128xf32>, vector<8x128xf32> -> vector<8x128xf32>
    %c0_3 = arith.constant 0 : index
    %c0_4 = arith.constant 0 : index
    %3 = vector.load %arg3[%c0_3, %c0_4] : memref<1x128xf32, #tpu.memory_space<vmem>>, vector<1x128xf32>
    %4 = vector.broadcast %3 : vector<1x128xf32> to vector<8x128xf32>
    %5 = arith.addf %2, %4 : vector<8x128xf32>
    %c0_5 = arith.constant 0 : index
    %c0_6 = arith.constant 0 : index
    %6 = vector.load %arg4[%c0_5, %c0_6] : memref<8x128xf32, #tpu.memory_space<vmem>>, vector<8x128xf32>
    tpu.vector_store %arg4[%c0_5, %c0_6], %5 {strides = array<i32>} : memref<8x128xf32, #tpu.memory_space<vmem>>, vector<8x128xf32>,
    return
  }
  func.func @transform_0(%arg0: i32) -> (i32, i32) {
    %c0_i32 = arith.constant 0 : i32
    %c0_i32_0 = arith.constant 0 : i32
    return %arg0, %c0_i32 : i32, i32
  }
  func.func @transform_1(%arg0: i32) -> (i32, i32) {
    %c0_i32 = arith.constant 0 : i32
    %c0_i32_0 = arith.constant 0 : i32
    %c0_i32_1 = arith.constant 0 : i32
    return %c0_i32, %c0_i32_0 : i32, i32
  }
  func.func @transform_2(%arg0: i32) -> (i32, i32) {
    %c0_i32 = arith.constant 0 : i32
    %c0_i32_0 = arith.constant 0 : i32
    %c0_i32_1 = arith.constant 0 : i32
    return %c0_i32, %c0_i32_0 : i32, i32
  }
  func.func @transform_3(%arg0: i32) -> (i32, i32) {
    %c0_i32 = arith.constant 0 : i32
    %c0_i32_0 = arith.constant 0 : i32
    return %arg0, %c0_i32 : i32, i32
  }
}

</mosaic_0001>

<llo_original>
// kernel: _forward_pallas.1
$region0: #{_forward_pallas.1}
  #allocation0 [shape = 'u32[]', space=smem, size = 0x4, offset = 0x4, fixed_abs, tag = 'smem constant byte address 0x4 - core index']
  #allocation1 [shape = 'u32[144,128]{1,0:T(1,128)}', space=vmem, size = 0x12000, scoped, tag = 'internal scratch']
  %s0 = inlined_call_operand.hbm [shape: f32[8,32], index: 0, kind: input, shape index: {}]
  %s1 = inlined_call_operand.hbm [shape: f32[32,128], index: 1, kind: input, shape index: {}]
  %s2 = inlined_call_operand.vmem [shape: f32[1,128], index: 2, kind: input, shape index: {}]
  %s3 = inlined_call_operand.hbm [shape: f32[8,128], index: 3, kind: output, shape index: {}]
  %s4 = sld [smem:[#allocation0]]
  $region30: #{_forward_pallas.1} parent=0
    _
  %s6 = ssub.s32 1, %s4
  %s7 = scalar_select 0, %s6, %s4
  $region1: #{_forward_pallas.1} parent=0
    #allocation2 [shape = 'u8[4096]{0}', space=vmem, size = 0x1000, scoped, tag = 'input window, operand 0, single buffered']
    #allocation3 [shape = 's32[1]{0}', space=sflag, size = 0x4, scoped, tag = 'scoped memory for _forward_pallas.1']
    #allocation4 [shape = 's32[1]{0}', space=sflag, size = 0x4, scoped, tag = 'scoped memory for _forward_pallas.1']
    #allocation5 [shape = 'u8[16384]{0}', space=vmem, size = 0x4000, scoped, tag = 'input window, operand 1, single buffered']
    #allocation6 [shape = 's32[1]{0}', space=sflag, size = 0x4, scoped, tag = 'scoped memory for _forward_pallas.1']
    #allocation7 [shape = 'u8[4096]{0}', space=vmem, size = 0x1000, scoped, tag = 'output window, operand 0, single buffered']
    %8 = vsyncpa [#allocation3], 0
    %9 = vsyncpa [#allocation6], 0
    %10 = vsyncpa [#allocation4], 0
    // Predicated region
    $region2: #{_forward_pallas.1} parent=1 // pred_check
      _
    $region3: #{_forward_pallas.1} parent=1 // pred_check_branch
      %12 = sbr.rel (0) target = $region5
    $region4: #{_forward_pallas.1} parent=1 // pred_region
      %s14 = ssub.s32 128, 128
      %15 = vsyncadd [#allocation3], %s14
      %s17 = sshll.u32 [#allocation2], 4
      %s18 = int_to_ptr.vmem [resolvable:$true] %s17
      %20 = dma.hbm_to_vmem [thread:$0]  %s0, 128, %s18, [#allocation3]
    $region5: #{_forward_pallas.1} parent=1 // pred_fallthru
      _
    // Predicated region
    $region6: #{_forward_pallas.1} parent=1 // pred_check
      _
    $region7: #{_forward_pallas.1} parent=1 // pred_check_branch
      %22 = sbr.rel (0) target = $region9
    $region8: #{_forward_pallas.1} parent=1 // pred_region
      %s24 = ssub.s32 512, 512
      %25 = vsyncadd [#allocation6], %s24
      %s26 = sshll.u32 [#allocation5], 4
      %s27 = int_to_ptr.vmem [resolvable:$true] %s26
      %32 = dma.hbm_to_vmem [thread:$0]  %s1, 512, %s27, [#allocation6], 128, 128, 8
    $region9: #{_forward_pallas.1} parent=1 // pred_fallthru
      _
    // Predicated region
    $region10: #{_forward_pallas.1} parent=1 // pred_check
      _
    $region11: #{_forward_pallas.1} parent=1 // pred_check_branch
      %34 = sbr.rel (0) target = $region13
    $region12: #{_forward_pallas.1} parent=1 // pred_region
      _
    $region13: #{_forward_pallas.1} parent=1 // pred_fallthru
      _
    // Predicated region
    $region14: #{_forward_pallas.1} parent=1 // pred_check
      _
    $region15: #{_forward_pallas.1} parent=1 // pred_check_branch
      %36 = sbr.rel (0) target = $region17
    $region16: #{_forward_pallas.1} parent=1 // pred_region
      %37 = dma.done [#allocation3], 128
    $region17: #{_forward_pallas.1} parent=1 // pred_fallthru
      _
    // Predicated region
    $region18: #{_forward_pallas.1} parent=1 // pred_check
      _
    $region19: #{_forward_pallas.1} parent=1 // pred_check_branch
      %39 = sbr.rel (0) target = $region21
    $region20: #{_forward_pallas.1} parent=1 // pred_region
      %40 = dma.done [#allocation6], 512
    $region21: #{_forward_pallas.1} parent=1 // pred_fallthru
      _
    %v41 = vld [vmem:[#allocation2] sm:$0xff]
    %v42 = vld [vmem:[#allocation5] sm:$0xff]
    %v43 = vld [vmem:[#allocation5 + $0x8] sm:$0xff]
    %v44 = vld [vmem:[#allocation5 + $0x10] sm:$0xff]
    %v45 = vld [vmem:[#allocation5 + $0x18] sm:$0xff]
    %v46 = vld [vmem:[%s2] sm:$0x1]
    %v48 = vlaneseq
    %v49 = vshrl.u32 %v48, 7
    %v50 = vsub.s32 0, %v49
    %v51 = vrot.slane %v46, %v50
    %vm53 = vcmask 261120
    %v55 = vsel %vm53, %v41, 0
    %57 = vmatprep.subr.mxu0 0.0
    %58 = vmatpush1.msra.mxu0 %v42
    %59 = vmatprep.subr.mxu0 0.0
    %60 = vmatpush1.msra.mxu0 %v43
    %61 = vmatprep.subr.mxu0 0.0
    %62 = vmatpush1.msra.mxu0 %v44
    %63 = vmatprep.subr.mxu0 0.0
    %64 = vmatpush1.msra.mxu0 %v45
    %65 = vmatprep.subr.mxu0 0.0
    %66 = vmatpush1.msra.mxu0 0.0
    %67 = vmatprep.subr.mxu0 0.0
    %68 = vmatpush1.msra.mxu0 0.0
    %69 = vmatprep.subr.mxu0 0.0
    %70 = vmatpush1.msra.mxu0 0.0
    %71 = vmatprep.subr.mxu0 0.0
    %72 = vmatpush1.msra.mxu0 0.0
    %73 = vmatprep.subr.mxu0 0.0
    %74 = vmatpush1.msra.mxu0 0.0
    %75 = vmatprep.subr.mxu0 0.0
    %76 = vmatpush1.msra.mxu0 0.0
    %77 = vmatprep.subr.mxu0 0.0
    %78 = vmatpush1.msra.mxu0 0.0
    %79 = vmatprep.subr.mxu0 0.0
    %80 = vmatpush1.msra.mxu0 0.0
    %81 = vmatprep.subr.mxu0 0.0
    %82 = vmatpush1.msra.mxu0 0.0
    %83 = vmatprep.subr.mxu0 0.0
    %84 = vmatpush1.msra.mxu0 0.0
    %85 = vmatprep.subr.mxu0 0.0
    %86 = vmatpush1.msra.mxu0 0.0
    %87 = vmatprep.subr.mxu0 0.0
    %88 = vmatpush1.msra.mxu0 0.0
    %89 = vmatprep.subr.mxu0 0.0
    %90 = vmatpush1.msra.mxu0 0.0
    %91 = vmatprep.subr.mxu0 0.0
    %92 = vmatpush1.msra.mxu0 0.0
    %93 = vmatprep.subr.mxu0 0.0
    %94 = vmatpush1.msra.mxu0 0.0
    %95 = vmatprep.subr.mxu0 0.0
    %96 = vmatpush1.msra.mxu0 0.0
    %97 = vmatprep.subr.mxu0 0.0
    %98 = vmatpush1.msra.mxu0 0.0
    %99 = vmatprep.subr.mxu0 0.0
    %100 = vmatpush1.msra.mxu0 0.0
    %101 = vmatprep.subr.mxu0 0.0
    %102 = vmatpush1.msra.mxu0 0.0
    %103 = vmatprep.subr.mxu0 0.0
    %104 = vmatpush1.msra.mxu0 0.0
    %105 = vmatprep.subr.mxu0 0.0
    %106 = vmatpush1.msra.mxu0 0.0
    %107 = vmatprep.subr.mxu0 0.0
    %108 = vmatpush1.msra.mxu0 0.0
    %109 = vmatprep.subr.mxu0 0.0
    %110 = vmatpush1.msra.mxu0 0.0
    %111 = vmatprep.subr.mxu0 0.0
    %112 = vmatpush1.msra.mxu0 0.0
    %113 = vmatprep.subr.mxu0 0.0
    %114 = vmatpush1.msra.mxu0 0.0
    %115 = vmatprep.subr.mxu0 0.0
    %116 = vmatpush1.msra.mxu0 0.0
    %117 = vmatprep.subr.mxu0 0.0
    %118 = vmatpush1.msra.mxu0 0.0
    %119 = vmatprep.subr.mxu0 0.0
    %120 = vmatpush1.msra.mxu0 0.0
    %121 = vmatprep.mubr.f32.mxu0 0.0
    %122 = vmatmul.mubr.f32.gmra.mrb[0].mxu0 %v55
    %v123 = vpop.f32.mrb[0].mxu0
    %v124 = vadd.f32 %v51, %v123
    %v125 = vpop.f32.mrb[0].mxu0
    %126 = vdwg.mxu0
    %127 = vst [vmem:[#allocation7] sm:$0xff] %v124
    // Predicated region
    $region22: #{_forward_pallas.1} parent=1 // pred_check
      _
    $region23: #{_forward_pallas.1} parent=1 // pred_check_branch
      %129 = sbr.rel (0) target = $region25
    $region24: #{_forward_pallas.1} parent=1 // pred_region
      %s131 = ssub.s32 128, 128
      %132 = vsyncadd [#allocation4], %s131
      %s134 = sshll.u32 [#allocation7], 4
      %s135 = int_to_ptr.vmem [resolvable:$true] %s134
      %137 = dma.vmem_to_hbm [thread:$0]  %s135, 128, %s3, [#allocation4]
    $region25: #{_forward_pallas.1} parent=1 // pred_fallthru
      _
    // Predicated region
    $region26: #{_forward_pallas.1} parent=1 // pred_check
      _
    $region27: #{_forward_pallas.1} parent=1 // pred_check_branch
      %139 = sbr.rel (0) target = $region29
    $region28: #{_forward_pallas.1} parent=1 // pred_region
      %140 = dma.done [#allocation4], 128
    $region29: #{_forward_pallas.1} parent=1 // pred_fallthru
      _
    %141 = vsyncpa [#allocation3], 1
    %142 = vsyncpa [#allocation6], 1
    %143 = vsyncpa [#allocation4], 1

// kernel: _forward_pallas.1
$region0: #{_forward_pallas.1}
  #allocation0 [shape = 'u32[]', space=smem, size = 0x4, offset = 0x4, fixed_abs, tag = 'smem constant byte address 0x4 - core index']
  #allocation1 [shape = 'u32[144,128]{1,0:T(1,128)}', space=vmem, size = 0x12000, scoped, tag = 'internal scratch']
  %s0 = inlined_call_operand.hbm [shape: f32[8,32], index: 0, kind: input, shape index: {}]
  %s1 = inlined_call_operand.hbm [shape: f32[32,128], index: 1, kind: input, shape index: {}]
  %s2 = inlined_call_operand.vmem [shape: f32[1,128], index: 2, kind: input, shape index: {}]
  %s3 = inlined_call_operand.hbm [shape: f32[8,128], index: 3, kind: output, shape index: {}]
  %s4 = sld [smem:[#allocation0]]
  $region30: #{_forward_pallas.1} parent=0
    _
  %s6 = ssub.s32 1, %s4
  %s7 = scalar_select 0, %s6, %s4
  $region1: #{_forward_pallas.1} parent=0
    #allocation2 [shape = 'u8[4096]{0}', space=vmem, size = 0x1000, scoped, tag = 'input window, operand 0, single buffered']
    #allocation3 [shape = 's32[1]{0}', space=sflag, size = 0x4, scoped, tag = 'scoped memory for _forward_pallas.1']
    #allocation4 [shape = 's32[1]{0}', space=sflag, size = 0x4, scoped, tag = 'scoped memory for _forward_pallas.1']
    #allocation5 [shape = 'u8[16384]{0}', space=vmem, size = 0x4000, scoped, tag = 'input window, operand 1, single buffered']
    #allocation6 [shape = 's32[1]{0}', space=sflag, size = 0x4, scoped, tag = 'scoped memory for _forward_pallas.1']
    #allocation7 [shape = 'u8[4096]{0}', space=vmem, size = 0x1000, scoped, tag = 'output window, operand 0, single buffered']
    %8 = vsyncpa [#allocation3], 0
    %9 = vsyncpa [#allocation6], 0
    %10 = vsyncpa [#allocation4], 0
    // Predicated region
    $region2: #{_forward_pallas.1} parent=1 // pred_check
      _
    $region3: #{_forward_pallas.1} parent=1 // pred_check_branch
      %12 = sbr.rel (0) target = $region5
    $region4: #{_forward_pallas.1} parent=1 // pred_region
      %s14 = ssub.s32 128, 128
      %15 = vsyncadd [#allocation3], %s14
      %s17 = sshll.u32 [#allocation2], 4
      %s18 = int_to_ptr.vmem [resolvable:$true] %s17
      %20 = dma.hbm_to_vmem [thread:$0]  %s0, 128, %s18, [#allocation3]
    $region5: #{_forward_pallas.1} parent=1 // pred_fallthru
      _
    // Predicated region
    $region6: #{_forward_pallas.1} parent=1 // pred_check
      _
    $region7: #{_forward_pallas.1} parent=1 // pred_check_branch
      %22 = sbr.rel (0) target = $region9
    $region8: #{_forward_pallas.1} parent=1 // pred_region
      %s24 = ssub.s32 512, 512
      %25 = vsyncadd [#allocation6], %s24
      %s26 = sshll.u32 [#allocation5], 4
      %s27 = int_to_ptr.vmem [resolvable:$true] %s26
      %32 = dma.hbm_to_vmem [thread:$0]  %s1, 512, %s27, [#allocation6], 128, 128, 8
    $region9: #{_forward_pallas.1} parent=1 // pred_fallthru
      _
    // Predicated region
    $region10: #{_forward_pallas.1} parent=1 // pred_check
      _
    $region11: #{_forward_pallas.1} parent=1 // pred_check_branch
      %34 = sbr.rel (0) target = $region13
    $region12: #{_forward_pallas.1} parent=1 // pred_region
      _
    $region13: #{_forward_pallas.1} parent=1 // pred_fallthru
      _
    // Predicated region
    $region14: #{_forward_pallas.1} parent=1 // pred_check
      _
    $region15: #{_forward_pallas.1} parent=1 // pred_check_branch
      %36 = sbr.rel (0) target = $region17
    $region16: #{_forward_pallas.1} parent=1 // pred_region
      %37 = dma.done [#allocation3], 128
    $region17: #{_forward_pallas.1} parent=1 // pred_fallthru
      _
    // Predicated region
    $region18: #{_forward_pallas.1} parent=1 // pred_check
      _
    $region19: #{_forward_pallas.1} parent=1 // pred_check_branch
      %39 = sbr.rel (0) target = $region21
    $region20: #{_forward_pallas.1} parent=1 // pred_region
      %40 = dma.done [#allocation6], 512
    $region21: #{_forward_pallas.1} parent=1 // pred_fallthru
      _
    %v41 = vld [vmem:[#allocation2] sm:$0xff]
    %v42 = vld [vmem:[#allocation5] sm:$0xff]
    %v43 = vld [vmem:[#allocation5 + $0x8] sm:$0xff]
    %v44 = vld [vmem:[#allocation5 + $0x10] sm:$0xff]
    %v45 = vld [vmem:[#allocation5 + $0x18] sm:$0xff]
    %v46 = vld [vmem:[%s2] sm:$0x1]
    %v48 = vlaneseq
    %v49 = vshrl.u32 %v48, 7
    %v50 = vsub.s32 0, %v49
    %v51 = vrot.slane %v46, %v50
    %vm53 = vcmask 261120
    %v55 = vsel %vm53, %v41, 0
    %57 = vmatprep.subr.mxu0 0.0
    %58 = vmatpush1.msra.mxu0 %v42
    %59 = vmatprep.subr.mxu0 0.0
    %60 = vmatpush1.msra.mxu0 %v43
    %61 = vmatprep.subr.mxu0 0.0
    %62 = vmatpush1.msra.mxu0 %v44
    %63 = vmatprep.subr.mxu0 0.0
    %64 = vmatpush1.msra.mxu0 %v45
    %65 = vmatprep.subr.mxu0 0.0
    %66 = vmatpush1.msra.mxu0 0.0
    %67 = vmatprep.subr.mxu0 0.0
    %68 = vmatpush1.msra.mxu0 0.0
    %69 = vmatprep.subr.mxu0 0.0
    %70 = vmatpush1.msra.mxu0 0.0
    %71 = vmatprep.subr.mxu0 0.0
    %72 = vmatpush1.msra.mxu0 0.0
    %73 = vmatprep.subr.mxu0 0.0
    %74 = vmatpush1.msra.mxu0 0.0
    %75 = vmatprep.subr.mxu0 0.0
    %76 = vmatpush1.msra.mxu0 0.0
    %77 = vmatprep.subr.mxu0 0.0
    %78 = vmatpush1.msra.mxu0 0.0
    %79 = vmatprep.subr.mxu0 0.0
    %80 = vmatpush1.msra.mxu0 0.0
    %81 = vmatprep.subr.mxu0 0.0
    %82 = vmatpush1.msra.mxu0 0.0
    %83 = vmatprep.subr.mxu0 0.0
    %84 = vmatpush1.msra.mxu0 0.0
    %85 = vmatprep.subr.mxu0 0.0
    %86 = vmatpush1.msra.mxu0 0.0
    %87 = vmatprep.subr.mxu0 0.0
    %88 = vmatpush1.msra.mxu0 0.0
    %89 = vmatprep.subr.mxu0 0.0
    %90 = vmatpush1.msra.mxu0 0.0
    %91 = vmatprep.subr.mxu0 0.0
    %92 = vmatpush1.msra.mxu0 0.0
    %93 = vmatprep.subr.mxu0 0.0
    %94 = vmatpush1.msra.mxu0 0.0
    %95 = vmatprep.subr.mxu0 0.0
    %96 = vmatpush1.msra.mxu0 0.0
    %97 = vmatprep.subr.mxu0 0.0
    %98 = vmatpush1.msra.mxu0 0.0
    %99 = vmatprep.subr.mxu0 0.0
    %100 = vmatpush1.msra.mxu0 0.0
    %101 = vmatprep.subr.mxu0 0.0
    %102 = vmatpush1.msra.mxu0 0.0
    %103 = vmatprep.subr.mxu0 0.0
    %104 = vmatpush1.msra.mxu0 0.0
    %105 = vmatprep.subr.mxu0 0.0
    %106 = vmatpush1.msra.mxu0 0.0
    %107 = vmatprep.subr.mxu0 0.0
    %108 = vmatpush1.msra.mxu0 0.0
    %109 = vmatprep.subr.mxu0 0.0
    %110 = vmatpush1.msra.mxu0 0.0
    %111 = vmatprep.subr.mxu0 0.0
    %112 = vmatpush1.msra.mxu0 0.0
    %113 = vmatprep.subr.mxu0 0.0
    %114 = vmatpush1.msra.mxu0 0.0
    %115 = vmatprep.subr.mxu0 0.0
    %116 = vmatpush1.msra.mxu0 0.0
    %117 = vmatprep.subr.mxu0 0.0
    %118 = vmatpush1.msra.mxu0 0.0
    %119 = vmatprep.subr.mxu0 0.0
    %120 = vmatpush1.msra.mxu0 0.0
    %121 = vmatprep.mubr.f32.mxu0 0.0
    %122 = vmatmul.mubr.f32.gmra.mrb[0].mxu0 %v55
    %v123 = vpop.f32.mrb[0].mxu0
    %v124 = vadd.f32 %v51, %v123
    %v125 = vpop.f32.mrb[0].mxu0
    %126 = vdwg.mxu0
    %127 = vst [vmem:[#allocation7] sm:$0xff] %v124
    // Predicated region
    $region22: #{_forward_pallas.1} parent=1 // pred_check
      _
    $region23: #{_forward_pallas.1} parent=1 // pred_check_branch
      %129 = sbr.rel (0) target = $region25
    $region24: #{_forward_pallas.1} parent=1 // pred_region
      %s131 = ssub.s32 128, 128
      %132 = vsyncadd [#allocation4], %s131
      %s134 = sshll.u32 [#allocation7], 4
      %s135 = int_to_ptr.vmem [resolvable:$true] %s134
      %137 = dma.vmem_to_hbm [thread:$0]  %s135, 128, %s3, [#allocation4]
    $region25: #{_forward_pallas.1} parent=1 // pred_fallthru
      _
    // Predicated region
    $region26: #{_forward_pallas.1} parent=1 // pred_check
      _
    $region27: #{_forward_pallas.1} parent=1 // pred_check_branch
      %139 = sbr.rel (0) target = $region29
    $region28: #{_forward_pallas.1} parent=1 // pred_region
      %140 = dma.done [#allocation4], 128
    $region29: #{_forward_pallas.1} parent=1 // pred_fallthru
      _
    %141 = vsyncpa [#allocation3], 1
    %142 = vsyncpa [#allocation6], 1
    %143 = vsyncpa [#allocation4], 1

</llo_original>
